<compile_context>
chip_gen: v5e
topology: v5e:2x2
jax: 0.10.0
libtpu: 0.0.40
codegen_flags: <defaults>
</compile_context>

<pallas_src>
import functools

import jax
import jax.numpy as jnp
from jax.experimental import pallas as pl
from jax.experimental.pallas import tpu as pltpu


# --------------------------------------------------------------------------- kernel

def _head_kernel(x_ref, w_ref, b_ref, cls_ref, box_ref, *, kc, kc_pad):
    # x_ref:   (1, C, T)      one image's channel-major spatial tile
    # w_ref:   (Ktot, C)      fused [cls; (pad); box] weights (compute dtype)
    # b_ref:   (Ktot, 1)      fused biases (always f32)
    # cls_ref: (1, Kc, T), box_ref: (1, Kb, T)   lane-dense outputs (T is lane dim)
    x = x_ref[0]  # (C, T)
    out = jnp.dot(w_ref[...], x, preferred_element_type=jnp.float32)
    out = out + b_ref[...]  # f32 bias against f32 accumulator
    cls_ref[0] = out[:kc].astype(cls_ref.dtype)
    box_ref[0] = out[kc_pad:].astype(box_ref.dtype)


# --------------------------------------------------------------------------- helpers

def _tpu_generation():
    """Best-effort TPU generation from device_kind (0 = unknown)."""
    try:
        kind = jax.devices()[0].device_kind.lower()
    except Exception:
        return 0
    for g in (7, 6, 5, 4):
        if (f"v{g}" in kind) or (f"{g}x" in kind) or (f"{g}e" in kind) or (f"{g}p" in kind):
            return g
    return 0


def fuse_retinanet_head_params(w_cls, b_cls, w_box, b_box, *, compute_dtype=jnp.bfloat16):
    """Build fused [cls; pad; box] weights once; reuse across FPN-level calls.

    Weights are cast to `compute_dtype` (default bf16); biases stay f32 since they are
    added against the f32 MXU accumulator (precision for free, no bandwidth cost).
    """
    kc, c = w_cls.shape
    kb = w_box.shape[0]
    kc_pad = -(-kc // 8) * 8           # cls block padded to sublane multiple
    ktot = kc_pad + kb
    wdt = w_cls.dtype if compute_dtype is None else jnp.dtype(compute_dtype)
    w_all = jnp.zeros((ktot, c), dtype=wdt)
    w_all = w_all.at[:kc].set(w_cls.astype(wdt)).at[kc_pad:].set(w_box.astype(wdt))
    b_all = jnp.zeros((ktot, 1), dtype=jnp.float32)
    b_all = b_all.at[:kc, 0].set(b_cls.astype(jnp.float32))
    b_all = b_all.at[kc_pad:, 0].set(b_box.astype(jnp.float32))
    return dict(w_all=w_all, b_all=b_all, kc=kc, kc_pad=kc_pad, kb=kb, c=c)


# --------------------------------------------------------------------------- wrapper

def retinanet_head_pallas(x_nchw, w_cls=None, b_cls=None, w_box=None, b_box=None, *,
                          fused_params=None, compute_dtype=jnp.bfloat16,
                          out_dtype=None, t_hw_max=None):
    """x_nchw: (N, C, H, W). w_cls: (Kc, C) [PyTorch 1x1 conv weight squeezed],
    b_cls: (Kc,), w_box: (Kb, C), b_box: (Kb,).  Either pass the raw params or a
    precomputed `fused_params` from fuse_retinanet_head_params (shared across levels).
    Returns (cls_logits, bboxes) in NCHW, matching the PyTorch module's forward."""
    N, C, H, W = x_nchw.shape
    HW = H * W
    orig_dtype = x_nchw.dtype
    out_dtype = orig_dtype if out_dtype is None else jnp.dtype(out_dtype)

    if fused_params is None:
        fused_params = fuse_retinanet_head_params(
            w_cls, b_cls, w_box, b_box, compute_dtype=compute_dtype)
    w_all = fused_params["w_all"]
    b_all = fused_params["b_all"]
    Kc, kc_pad, Kb = fused_params["kc"], fused_params["kc_pad"], fused_params["kb"]
    ktot = kc_pad + Kb
    assert fused_params["c"] == C, "channel mismatch between x and fused params"

    # Activations in the compute dtype (bf16 default halves the dominant read stream;
    # accumulation stays f32 inside the kernel).
    if compute_dtype is not None:
        x_nchw = x_nchw.astype(compute_dtype)
    in_dtype = x_nchw.dtype

    # Pure reshape: NCHW is already channel-major over the spatial axis.
    x = x_nchw.reshape(N, C, HW)

    # ---- generation-aware tiling -------------------------------------------------
    gen = _tpu_generation()
    big_vmem = gen in (5, 6)          # 128 MiB VMEM parts
    num_tc = 2 if gen == 7 else 1     # v7x megacore

    if t_hw_max is None:
        t_hw_max = 8192 if big_vmem else 2048

    if HW <= t_hw_max:
        t_hw = HW
    else:
        t_hw = max(128, (t_hw_max // 128) * 128)

    # v7x: make sure both TensorCores get grid steps for single-image / small levels.
    if num_tc > 1 and N * pl.cdiv(HW, t_hw) < num_tc and HW > 128:
        t_hw = max(128, (((HW + num_tc - 1) // num_tc) // 128) * 128)

    grid = (N, pl.cdiv(HW, t_hw))

    # ---- VMEM budget (computed footprint + margin, generation-aware cap) ----------
    in_isz = jnp.dtype(in_dtype).itemsize
    out_isz = jnp.dtype(out_dtype).itemsize
    w_isz = jnp.dtype(w_all.dtype).itemsize
    n_x_buf = 3 if big_vmem else 2                       # Buffered(3) x on 128-MiB parts
    need = (n_x_buf * C * t_hw * in_isz                  # x tiles
            + 2 * (Kc + Kb) * t_hw * out_isz             # double-buffered outputs
            + 2 * (ktot * C * w_isz + ktot * 4)          # weights/bias (conservative)
            + ktot * t_hw * 4)                           # f32 matmul intermediate
    vmem_cap = (100 << 20) if big_vmem else (40 << 20)   # v7x: 64 MiB physical -> ~40 MiB
    vmem_limit = min(vmem_cap, max(16 << 20, int(need * 1.5) + (4 << 20)))

    cost = pl.CostEstimate(
        flops=2 * N * HW * C * (Kc + Kb),
        transcendentals=0,
        bytes_accessed=int(N * C * HW * in_isz
                           + N * (Kc + Kb) * HW * out_isz
                           + ktot * C * w_isz + ktot * 4),
    )

    kernel = functools.partial(_head_kernel, kc=Kc, kc_pad=kc_pad)
    out_shape = (jax.ShapeDtypeStruct((N, Kc, HW), out_dtype),
                 jax.ShapeDtypeStruct((N, Kb, HW), out_dtype))

    def _build(use_pipeline_modes):
        def spec(shape, index_map, bufs=None):
            if use_pipeline_modes and bufs is not None:
                try:
                    return pl.BlockSpec(shape, index_map,
                                        pipeline_mode=pl.Buffered(bufs))
                except TypeError:
                    pass
            return pl.BlockSpec(shape, index_map)

        x_bufs = 3 if big_vmem else None        # deeper pipeline only on 128-MiB parts
        in_specs = [
            spec((1, C, t_hw), lambda n, j: (n, 0, j), x_bufs),
            spec((ktot, C), lambda n, j: (0, 0), 1),   # constant weights: single buffer
            spec((ktot, 1), lambda n, j: (0, 0), 1),   # constant bias:    single buffer
        ]
        out_specs = [
            pl.BlockSpec((1, Kc, t_hw), lambda n, j: (n, 0, j)),
            pl.BlockSpec((1, Kb, t_hw), lambda n, j: (n, 0, j)),
        ]
        return pl.pallas_call(
            kernel,
            out_shape=out_shape,
            grid=grid,
            in_specs=in_specs,
            out_specs=out_specs,
            compiler_params=pltpu.CompilerParams(
                dimension_semantics=("parallel", "parallel"),
                vmem_limit_bytes=vmem_limit,
            ),
            cost_estimate=cost,
        )

    use_pm = hasattr(pl, "Buffered")
    try:
        cls_mat, box_mat = _build(use_pm)(x, w_all, b_all)
    except Exception:
        # Fallback for Pallas versions / lowerings without BlockSpec pipeline_mode.
        cls_mat, box_mat = _build(False)(x, w_all, b_all)

    # (N, K, HW) -> NCHW via pure reshape (no transpose).
    cls_out = cls_mat.reshape(N, Kc, H, W)
    box_out = box_mat.reshape(N, Kb, H, W)
    return cls_out, box_out


# --------------------------------------------------------------------------- test

if __name__ == "__main__":
    # Small shapes consistent with the module's forward.
    batch = 2
    in_channels = 4
    spatial = 16
    num_anchors = 3
    num_classes = 5
    Kc = num_anchors * num_classes   # 15
    Kb = num_anchors * 4             # 12

    key = jax.random.PRNGKey(0)
    k_x, k_wc, k_bc, k_wb, k_bb = jax.random.split(key, 5)

    x = jax.random.normal(k_x, (batch, in_channels, spatial, spatial), jnp.float32)
    # Deterministic synthetic parameters (shapes match nn.Conv2d(kernel_size=1)).
    w_cls = jax.random.normal(k_wc, (Kc, in_channels), jnp.float32) * 0.1
    b_cls = jax.random.normal(k_bc, (Kc,), jnp.float32) * 0.1
    w_box = jax.random.normal(k_wb, (Kb, in_channels), jnp.float32) * 0.1
    b_box = jax.random.normal(k_bb, (Kb,), jnp.float32) * 0.1

    # Reference: plain JAX 1x1 conv == channel matmul (f32).
    ref_cls = jnp.einsum("nchw,kc->nkhw", x, w_cls) + b_cls[None, :, None, None]
    ref_box = jnp.einsum("nchw,kc->nkhw", x, w_box) + b_box[None, :, None, None]

    # 1) Exact-precision path (f32 compute) — tight correctness check.
    cls_f32, box_f32 = retinanet_head_pallas(
        x, w_cls, b_cls, w_box, b_box, compute_dtype=jnp.float32)
    jax.block_until_ready((cls_f32, box_f32))
    assert cls_f32.shape == (batch, Kc, spatial, spatial)
    assert box_f32.shape == (batch, Kb, spatial, spatial)
    assert jnp.allclose(cls_f32, ref_cls, atol=1e-4, rtol=1e-4)
    assert jnp.allclose(box_f32, ref_box, atol=1e-4, rtol=1e-4)

    # 2) Default performance path (bf16 compute, f32 accumulation), fused params built
    #    once and reused — looser tolerance for bf16 input rounding.
    fused = fuse_retinanet_head_params(w_cls, b_cls, w_box, b_box)  # reuse across FPN levels
    cls_bf, box_bf = retinanet_head_pallas(x, fused_params=fused)
    jax.block_until_ready((cls_bf, box_bf))
    assert cls_bf.dtype == x.dtype and box_bf.dtype == x.dtype
    assert jnp.allclose(cls_bf, ref_cls, atol=2e-2, rtol=2e-2)
    assert jnp.allclose(box_bf, ref_box, atol=2e-2, rtol=2e-2)

    print("KERNEL_OK")
</pallas_src>

<mosaic_0001>
module attributes {stable_mosaic.version = 11 : i64} {
  func.func @_head_kernel(%arg0: i32, %arg1: i32, %arg2: memref<1x4x256xf32, #tpu.memory_space<vmem>>, %arg3: memref<28x4xf32, #tpu.memory_space<vmem>>, %arg4: memref<28x1xf32, #tpu.memory_space<vmem>>, %arg5: memref<1x15x256xf32, #tpu.memory_space<vmem>>, %arg6: memref<1x12x256xf32, #tpu.memory_space<vmem>>) attributes {dimension_semantics = [#tpu.dimension_semantics<parallel>, #tpu.dimension_semantics<parallel>], iteration_bounds = array<i64: 2, 1>, scalar_prefetch = 0 : i64, scratch_operands = 0 : i64, tpu.core_type = #tpu.core_type<tc>, window_params = [{transform_indices = @transform_0, window_bounds = array<i64: 1, 4, 256>}, {pipeline_mode = #tpu.pipeline_mode<synchronous>, transform_indices = @transform_1, window_bounds = array<i64: 28, 4>}, {pipeline_mode = #tpu.pipeline_mode<synchronous>, transform_indices = @transform_2, window_bounds = array<i64: 28, 1>}, {transform_indices = @transform_3, window_bounds = array<i64: 1, 15, 256>}, {transform_indices = @transform_4, window_bounds = array<i64: 1, 12, 256>}]} {
    %c0 = arith.constant 0 : index
    %c0_0 = arith.constant 0 : index
    %c0_1 = arith.constant 0 : index
    %0 = vector.load %arg2[%c0, %c0_0, %c0_1] : memref<1x4x256xf32, #tpu.memory_space<vmem>>, vector<1x4x256xf32>
    %1 = vector.shape_cast %0 : vector<1x4x256xf32> to vector<4x256xf32>
    %c0_2 = arith.constant 0 : index
    %c0_3 = arith.constant 0 : index
    %2 = vector.load %arg3[%c0_2, %c0_3] : memref<28x4xf32, #tpu.memory_space<vmem>>, vector<28x4xf32>
    %cst = arith.constant dense<0.000000e+00> : vector<28x256xf32>
    %3 = tpu.matmul %2, %1, %cst {dimension_numbers = #tpu.dot_dimension_numbers<[1], [0], [0], [1], [0, 0, 1, 1], [], []>} : vector<28x4xf32>, vector<4x256xf32>, vector<28x256xf32> -> vector<28x256xf32>
    %c0_4 = arith.constant 0 : index
    %c0_5 = arith.constant 0 : index
    %4 = vector.load %arg4[%c0_4, %c0_5] : memref<28x1xf32, #tpu.memory_space<vmem>>, vector<28x1xf32>
    %5 = vector.broadcast %4 : vector<28x1xf32> to vector<28x256xf32>
    %6 = arith.addf %3, %5 : vector<28x256xf32>
    %7 = vector.extract_strided_slice %6 {offsets = [0, 0], sizes = [15, 256], strides = [1, 1]} : vector<28x256xf32> to vector<15x256xf32>
    %c0_6 = arith.constant 0 : index
    %c0_7 = arith.constant 0 : index
    %c0_8 = arith.constant 0 : index
    %8 = vector.load %arg5[%c0_6, %c0_7, %c0_8] : memref<1x15x256xf32, #tpu.memory_space<vmem>>, vector<1x15x256xf32>
    %9 = vector.shape_cast %8 : vector<1x15x256xf32> to vector<15x256xf32>
    %10 = vector.shape_cast %7 : vector<15x256xf32> to vector<1x15x256xf32>
    tpu.vector_store %arg5[%c0_6, %c0_7, %c0_8], %10 {strides = array<i32>} : memref<1x15x256xf32, #tpu.memory_space<vmem>>, vector<1x15x256xf32>,
    %11 = vector.extract_strided_slice %6 {offsets = [16, 0], sizes = [12, 256], strides = [1, 1]} : vector<28x256xf32> to vector<12x256xf32>
    %c0_9 = arith.constant 0 : index
    %c0_10 = arith.constant 0 : index
    %c0_11 = arith.constant 0 : index
    %12 = vector.load %arg6[%c0_9, %c0_10, %c0_11] : memref<1x12x256xf32, #tpu.memory_space<vmem>>, vector<1x12x256xf32>
    %13 = vector.shape_cast %12 : vector<1x12x256xf32> to vector<12x256xf32>
    %14 = vector.shape_cast %11 : vector<12x256xf32> to vector<1x12x256xf32>
    tpu.vector_store %arg6[%c0_9, %c0_10, %c0_11], %14 {strides = array<i32>} : memref<1x12x256xf32, #tpu.memory_space<vmem>>, vector<1x12x256xf32>,
    return
  }
  func.func @transform_0(%arg0: i32, %arg1: i32) -> (i32, i32, i32) {
    %c0_i32 = arith.constant 0 : i32
    %c0_i32_0 = arith.constant 0 : i32
    return %arg0, %c0_i32, %arg1 : i32, i32, i32
  }
  func.func @transform_1(%arg0: i32, %arg1: i32) -> (i32, i32) {
    %c0_i32 = arith.constant 0 : i32
    %c0_i32_0 = arith.constant 0 : i32
    %c0_i32_1 = arith.constant 0 : i32
    return %c0_i32, %c0_i32_0 : i32, i32
  }
  func.func @transform_2(%arg0: i32, %arg1: i32) -> (i32, i32) {
    %c0_i32 = arith.constant 0 : i32
    %c0_i32_0 = arith.constant 0 : i32
    %c0_i32_1 = arith.constant 0 : i32
    return %c0_i32, %c0_i32_0 : i32, i32
  }
  func.func @transform_3(%arg0: i32, %arg1: i32) -> (i32, i32, i32) {
    %c0_i32 = arith.constant 0 : i32
    %c0_i32_0 = arith.constant 0 : i32
    return %arg0, %c0_i32, %arg1 : i32, i32, i32
  }
  func.func @transform_4(%arg0: i32, %arg1: i32) -> (i32, i32, i32) {
    %c0_i32 = arith.constant 0 : i32
    %c0_i32_0 = arith.constant 0 : i32
    return %arg0, %c0_i32, %arg1 : i32, i32, i32
  }
}

module attributes {stable_mosaic.version = 11 : i64} {
  func.func @_head_kernel(%arg0: i32, %arg1: i32, %arg2: memref<1x4x256xf32, #tpu.memory_space<vmem>>, %arg3: memref<28x4xf32, #tpu.memory_space<vmem>>, %arg4: memref<28x1xf32, #tpu.memory_space<vmem>>, %arg5: memref<1x15x256xf32, #tpu.memory_space<vmem>>, %arg6: memref<1x12x256xf32, #tpu.memory_space<vmem>>) attributes {dimension_semantics = [#tpu.dimension_semantics<parallel>, #tpu.dimension_semantics<parallel>], iteration_bounds = array<i64: 2, 1>, scalar_prefetch = 0 : i64, scratch_operands = 0 : i64, tpu.core_type = #tpu.core_type<tc>, window_params = [{transform_indices = @transform_0, window_bounds = array<i64: 1, 4, 256>}, {pipeline_mode = #tpu.pipeline_mode<synchronous>, transform_indices = @transform_1, window_bounds = array<i64: 28, 4>}, {pipeline_mode = #tpu.pipeline_mode<synchronous>, transform_indices = @transform_2, window_bounds = array<i64: 28, 1>}, {transform_indices = @transform_3, window_bounds = array<i64: 1, 15, 256>}, {transform_indices = @transform_4, window_bounds = array<i64: 1, 12, 256>}]} {
    %c0 = arith.constant 0 : index
    %c0_0 = arith.constant 0 : index
    %c0_1 = arith.constant 0 : index
    %0 = vector.load %arg2[%c0, %c0_0, %c0_1] : memref<1x4x256xf32, #tpu.memory_space<vmem>>, vector<1x4x256xf32>
    %1 = vector.shape_cast %0 : vector<1x4x256xf32> to vector<4x256xf32>
    %c0_2 = arith.constant 0 : index
    %c0_3 = arith.constant 0 : index
    %2 = vector.load %arg3[%c0_2, %c0_3] : memref<28x4xf32, #tpu.memory_space<vmem>>, vector<28x4xf32>
    %cst = arith.constant dense<0.000000e+00> : vector<28x256xf32>
    %3 = tpu.matmul %2, %1, %cst {dimension_numbers = #tpu.dot_dimension_numbers<[1], [0], [0], [1], [0, 0, 1, 1], [], []>} : vector<28x4xf32>, vector<4x256xf32>, vector<28x256xf32> -> vector<28x256xf32>
    %c0_4 = arith.constant 0 : index
    %c0_5 = arith.constant 0 : index
    %4 = vector.load %arg4[%c0_4, %c0_5] : memref<28x1xf32, #tpu.memory_space<vmem>>, vector<28x1xf32>
    %5 = vector.broadcast %4 : vector<28x1xf32> to vector<28x256xf32>
    %6 = arith.addf %3, %5 : vector<28x256xf32>
    %7 = vector.extract_strided_slice %6 {offsets = [0, 0], sizes = [15, 256], strides = [1, 1]} : vector<28x256xf32> to vector<15x256xf32>
    %c0_6 = arith.constant 0 : index
    %c0_7 = arith.constant 0 : index
    %c0_8 = arith.constant 0 : index
    %8 = vector.load %arg5[%c0_6, %c0_7, %c0_8] : memref<1x15x256xf32, #tpu.memory_space<vmem>>, vector<1x15x256xf32>
    %9 = vector.shape_cast %8 : vector<1x15x256xf32> to vector<15x256xf32>
    %10 = vector.shape_cast %7 : vector<15x256xf32> to vector<1x15x256xf32>
    tpu.vector_store %arg5[%c0_6, %c0_7, %c0_8], %10 {strides = array<i32>} : memref<1x15x256xf32, #tpu.memory_space<vmem>>, vector<1x15x256xf32>,
    %11 = vector.extract_strided_slice %6 {offsets = [16, 0], sizes = [12, 256], strides = [1, 1]} : vector<28x256xf32> to vector<12x256xf32>
    %c0_9 = arith.constant 0 : index
    %c0_10 = arith.constant 0 : index
    %c0_11 = arith.constant 0 : index
    %12 = vector.load %arg6[%c0_9, %c0_10, %c0_11] : memref<1x12x256xf32, #tpu.memory_space<vmem>>, vector<1x12x256xf32>
    %13 = vector.shape_cast %12 : vector<1x12x256xf32> to vector<12x256xf32>
    %14 = vector.shape_cast %11 : vector<12x256xf32> to vector<1x12x256xf32>
    tpu.vector_store %arg6[%c0_9, %c0_10, %c0_11], %14 {strides = array<i32>} : memref<1x12x256xf32, #tpu.memory_space<vmem>>, vector<1x12x256xf32>,
    return
  }
  func.func @transform_0(%arg0: i32, %arg1: i32) -> (i32, i32, i32) {
    %c0_i32 = arith.constant 0 : i32
    %c0_i32_0 = arith.constant 0 : i32
    return %arg0, %c0_i32, %arg1 : i32, i32, i32
  }
  func.func @transform_1(%arg0: i32, %arg1: i32) -> (i32, i32) {
    %c0_i32 = arith.constant 0 : i32
    %c0_i32_0 = arith.constant 0 : i32
    %c0_i32_1 = arith.constant 0 : i32
    return %c0_i32, %c0_i32_0 : i32, i32
  }
  func.func @transform_2(%arg0: i32, %arg1: i32) -> (i32, i32) {
    %c0_i32 = arith.constant 0 : i32
    %c0_i32_0 = arith.constant 0 : i32
    %c0_i32_1 = arith.constant 0 : i32
    return %c0_i32, %c0_i32_0 : i32, i32
  }
  func.func @transform_3(%arg0: i32, %arg1: i32) -> (i32, i32, i32) {
    %c0_i32 = arith.constant 0 : i32
    %c0_i32_0 = arith.constant 0 : i32
    return %arg0, %c0_i32, %arg1 : i32, i32, i32
  }
  func.func @transform_4(%arg0: i32, %arg1: i32) -> (i32, i32, i32) {
    %c0_i32 = arith.constant 0 : i32
    %c0_i32_0 = arith.constant 0 : i32
    return %arg0, %c0_i32, %arg1 : i32, i32, i32
  }
}

</mosaic_0001>

<llo_original>
// kernel: tpu_custom_call.1
$region0: #{tpu_custom_call.1}
  #allocation0 [shape = 'u32[]', space=smem, size = 0x4, offset = 0x4, fixed_abs, tag = 'smem constant byte address 0x4 - core index']
  #allocation1 [shape = 'u32[72,128]{1,0:T(1,128)}', space=vmem, size = 0x9000, scoped, tag = 'internal scratch']
  %s0 = inlined_call_operand.vmem [shape: f32[2,4,256], index: 0, kind: input, shape index: {}]
  %s1 = inlined_call_operand.vmem [shape: f32[28,4], index: 1, kind: input, shape index: {}]
  %s2 = inlined_call_operand.vmem [shape: f32[28,1], index: 2, kind: input, shape index: {}]
  %s3 = inlined_call_operand.vmem [shape: f32[2,15,256], index: 3, kind: output, shape index: {0}]
  %s4 = inlined_call_operand.vmem [shape: f32[2,12,256], index: 4, kind: output, shape index: {1}]
  %5 = xla_tuple %s3, %s4
  %s6 = sld [smem:[#allocation0]]
  $region53: #{tpu_custom_call.1} parent=0
    _
  %s8 = ssub.s32 1, %s6
  %s9 = scalar_select 0, %s8, %s6
  loop: start=0, step=1, limit=4
  $region2: #{tpu_custom_call.1} parent=0 // loop_pre_header
    _
  $region3: #{tpu_custom_call.1} parent=0 // loop_header
    %s11 = sphi 0, %s15
    %p12 = scmp.ge.s32.totalorder %s11, 4
    %s18 = sphi 0, %s30
    %s19 = sphi 0, %s26
    %s20 = sphi 0, %s18
    %s21 = sphi 0, %s19
    %s22 = sphi 0, %s20
    %s23 = sphi 0, %s21
    %s35 = sphi 0, %s37
    %s38 = sphi 0, %s35
    %s39 = sphi 0, %s38
    %s55 = sphi 0, %s39
    %s59 = sphi 0, %s59
    %s61 = sphi 0, %s59
    %s62 = sphi 0, %s61
    %s76 = sphi 0, %s62
    %s80 = sphi 0, %s80
    %s82 = sphi 0, %s80
    %s83 = sphi 0, %s82
    %s97 = sphi 0, %s83
    %s105 = sphi 0, %s107
    %s108 = sphi 0, %s105
    %s109 = sphi 0, %s108
    %s125 = sphi 0, %s109
    %s133 = sphi 0, %s135
    %s136 = sphi 0, %s133
    %s137 = sphi 0, %s136
    %s153 = sphi 0, %s137
  $region4: #{tpu_custom_call.1} parent=0 // loop_header_branch
    %14 = sbr.rel (%p12) target = $region8
  $region5: #{tpu_custom_call.1} parent=0 // loop_body
    %s16 = ssub.s32 %s11, 1
    %s17 = ssub.s32 %s11, 2
    %s24 = sadd.s32 1, %s19
    %p25 = scmp.ge.s32.totalorder %s24, 1
    %s26 = scalar_select %p25, 0, %s24
    %s27 = sadd.s32 1, %s18
    %s28 = scalar_select %p25, %s27, %s18
    %p29 = scmp.ge.s32.totalorder %s28, 2
    %s30 = scalar_select %p29, 0, %s28
    %s31 = ssub.s32 %s18, %s30
    %s32 = ssub.s32 %s19, %s26
    %s33 = sor.u32 %s31, %s32
    %p34 = scmp.eq.s32.totalorder %s33, 0
    %s36 = sadd.s32 %s35, 1
    %s37 = scalar_select %p34, %s35, %s36
    %p40 = pneg %p34
    %p41 = scmp.eq.s32.totalorder %s11, 1
    %p42 = por %p40, %p41
    %p43 = scmp.ne.s32.totalorder %s35, %s38
    %p44 = scmp.eq.s32.totalorder %s11, 0
    %p45 = por %p43, %p44
    %p46 = scmp.ne.s32.totalorder %s35, %s38
    %p47 = scmp.eq.s32.totalorder %s16, 1
    %p48 = por %p46, %p47
    %p49 = scmp.ne.s32.totalorder %s38, %s39
    %p50 = scmp.eq.s32.totalorder %s16, 0
    %p51 = por %p49, %p50
    %p52 = scmp.ne.s32.totalorder %s38, %s39
    %p53 = scmp.eq.s32.totalorder %s17, 1
    %p54 = por %p52, %p53
    %p56 = scmp.ne.s32.totalorder %s39, %s55
    %p57 = scmp.eq.s32.totalorder %s17, 0
    %p58 = por %p56, %p57
    %s60 = sadd.s32 %s59, 1
    %p63 = scmp.eq.s32.totalorder %s11, 1
    %p64 = scmp.ne.s32.totalorder %s59, %s61
    %p65 = scmp.eq.s32.totalorder %s11, 0
    %p66 = por %p64, %p65
    %p67 = scmp.ne.s32.totalorder %s59, %s61
    %p68 = scmp.eq.s32.totalorder %s16, 1
    %p69 = por %p67, %p68
    %p70 = scmp.ne.s32.totalorder %s61, %s62
    %p71 = scmp.eq.s32.totalorder %s16, 0
    %p72 = por %p70, %p71
    %p73 = scmp.ne.s32.totalorder %s61, %s62
    %p74 = scmp.eq.s32.totalorder %s17, 1
    %p75 = por %p73, %p74
    %p77 = scmp.ne.s32.totalorder %s62, %s76
    %p78 = scmp.eq.s32.totalorder %s17, 0
    %p79 = por %p77, %p78
    %s81 = sadd.s32 %s80, 1
    %p84 = scmp.eq.s32.totalorder %s11, 1
    %p85 = scmp.ne.s32.totalorder %s80, %s82
    %p86 = scmp.eq.s32.totalorder %s11, 0
    %p87 = por %p85, %p86
    %p88 = scmp.ne.s32.totalorder %s80, %s82
    %p89 = scmp.eq.s32.totalorder %s16, 1
    %p90 = por %p88, %p89
    %p91 = scmp.ne.s32.totalorder %s82, %s83
    %p92 = scmp.eq.s32.totalorder %s16, 0
    %p93 = por %p91, %p92
    %p94 = scmp.ne.s32.totalorder %s82, %s83
    %p95 = scmp.eq.s32.totalorder %s17, 1
    %p96 = por %p94, %p95
    %p98 = scmp.ne.s32.totalorder %s83, %s97
    %p99 = scmp.eq.s32.totalorder %s17, 0
    %p100 = por %p98, %p99
    %s101 = ssub.s32 %s18, %s30
    %s102 = ssub.s32 %s19, %s26
    %s103 = sor.u32 %s101, %s102
    %p104 = scmp.eq.s32.totalorder %s103, 0
    %s106 = sadd.s32 %s105, 1
    %s107 = scalar_select %p104, %s105, %s106
    %p110 = pneg %p104
    %p111 = scmp.eq.s32.totalorder %s11, 1
    %p112 = por %p110, %p111
    %p113 = scmp.ne.s32.totalorder %s105, %s108
    %p114 = scmp.eq.s32.totalorder %s11, 0
    %p115 = por %p113, %p114
    %p116 = scmp.ne.s32.totalorder %s105, %s108
    %p117 = scmp.eq.s32.totalorder %s16, 1
    %p118 = por %p116, %p117
    %p119 = scmp.ne.s32.totalorder %s108, %s109
    %p120 = scmp.eq.s32.totalorder %s16, 0
    %p121 = por %p119, %p120
    %p122 = scmp.ne.s32.totalorder %s108, %s109
    %p123 = scmp.eq.s32.totalorder %s17, 1
    %p124 = por %p122, %p123
    %p126 = scmp.ne.s32.totalorder %s109, %s125
    %p127 = scmp.eq.s32.totalorder %s17, 0
    %p128 = por %p126, %p127
    %s129 = ssub.s32 %s18, %s30
    %s130 = ssub.s32 %s19, %s26
    %s131 = sor.u32 %s129, %s130
    %p132 = scmp.eq.s32.totalorder %s131, 0
    %s134 = sadd.s32 %s133, 1
    %s135 = scalar_select %p132, %s133, %s134
    %p138 = pneg %p132
    %p139 = scmp.eq.s32.totalorder %s11, 1
    %p140 = por %p138, %p139
    %p141 = scmp.ne.s32.totalorder %s133, %s136
    %p142 = scmp.eq.s32.totalorder %s11, 0
    %p143 = por %p141, %p142
    %p144 = scmp.ne.s32.totalorder %s133, %s136
    %p145 = scmp.eq.s32.totalorder %s16, 1
    %p146 = por %p144, %p145
    %p147 = scmp.ne.s32.totalorder %s136, %s137
    %p148 = scmp.eq.s32.totalorder %s16, 0
    %p149 = por %p147, %p148
    %p150 = scmp.ne.s32.totalorder %s136, %s137
    %p151 = scmp.eq.s32.totalorder %s17, 1
    %p152 = por %p150, %p151
    %p154 = scmp.ne.s32.totalorder %s137, %s153
    %p155 = scmp.eq.s32.totalorder %s17, 0
    %p156 = por %p154, %p155
    %p157 = scmp.le.s32.totalorder 1, %s11
    %p158 = scmp.lt.s32.totalorder %s11, 3
    %p159 = pnand %p157, %p158
    %p160 = pneg %p159
    // Predicated region
    $region9: #{tpu_custom_call.1} parent=5 // pred_check
      _
    $region10: #{tpu_custom_call.1} parent=5 // pred_check_branch
      %162 = sbr.rel (%p159) target = $region12
    $region11: #{tpu_custom_call.1} parent=5 // pred_region
      %s163 = ssub.s32 %s11, 1
      // Predicated region
      $region13: #{tpu_custom_call.1} parent=11 // pred_check
        %p164 = pneg %p72
      $region14: #{tpu_custom_call.1} parent=11 // pred_check_branch
        %166 = sbr.rel (%p164) target = $region16
      $region15: #{tpu_custom_call.1} parent=11 // pred_region
        _
      $region16: #{tpu_custom_call.1} parent=11 // pred_fallthru
        _
      // Predicated region
      $region17: #{tpu_custom_call.1} parent=11 // pred_check
        %p167 = pneg %p93
      $region18: #{tpu_custom_call.1} parent=11 // pred_check_branch
        %169 = sbr.rel (%p167) target = $region20
      $region19: #{tpu_custom_call.1} parent=11 // pred_region
        _
      $region20: #{tpu_custom_call.1} parent=11 // pred_fallthru
        _
    $region12: #{tpu_custom_call.1} parent=5 // pred_fallthru
      _
    %p170 = scmp.lt.s32.totalorder %s11, 2
    // Predicated region
    $region21: #{tpu_custom_call.1} parent=5 // pred_check
      %p171 = pneg %p170
    $region22: #{tpu_custom_call.1} parent=5 // pred_check_branch
      %173 = sbr.rel (%p171) target = $region24
    $region23: #{tpu_custom_call.1} parent=5 // pred_region
      // Predicated region
      $region25: #{tpu_custom_call.1} parent=23 // pred_check
        %p174 = pneg %p45
      $region26: #{tpu_custom_call.1} parent=23 // pred_check_branch
        %176 = sbr.rel (%p174) target = $region28
      $region27: #{tpu_custom_call.1} parent=23 // pred_region
        %s177 = smul.u32 2, %s19
        %p178 = scmp.lt.s32.totalorder %s18, 1
        %s179 = scalar_select %p178, %s18, 1
        %p180 = scmp.lt.s32.totalorder %s177, 1
        %s181 = scalar_select %p180, %s177, 1
        %s182 = smul.addr %s179, 2
        %s183 = sadd.s32 %s181, %s182
        %s184 = smul.addr %s183, 4
        %s185 = scalar_lea.vmem %s0, %s184
        %s186 = smul.u32 2, %s19
      $region28: #{tpu_custom_call.1} parent=23 // pred_fallthru
        _
    $region24: #{tpu_custom_call.1} parent=5 // pred_fallthru
      _
    %p187 = scmp.le.s32.totalorder 1, %s11
    %p188 = scmp.lt.s32.totalorder %s11, 3
    %p189 = pnand %p187, %p188
    %p190 = pneg %p189
    // Predicated region
    $region29: #{tpu_custom_call.1} parent=5 // pred_check
      _
    $region30: #{tpu_custom_call.1} parent=5 // pred_check_branch
      %192 = sbr.rel (%p189) target = $region32
    $region31: #{tpu_custom_call.1} parent=5 // pred_region
      %s193 = ssub.s32 %s11, 1
      %s194 = smul.u32 2, %s21
      %p195 = scmp.lt.s32.totalorder %s20, 1
      %s196 = scalar_select %p195, %s20, 1
      %p197 = scmp.lt.s32.totalorder %s194, 1
      %s198 = scalar_select %p197, %s194, 1
      %s199 = smul.addr %s196, 2
      %s200 = sadd.s32 %s198, %s199
      %s201 = smul.addr %s200, 4
      %s202 = scalar_lea.vmem %s0, %s201
      %p203 = pneg %p51
      %p204 = pneg %p48
      %p205 = pneg %p72
      %p206 = pneg %p69
      %p207 = pneg %p93
      %p208 = pneg %p90
      %p209 = pneg %p121
      %p210 = pneg %p118
      %s211 = smul.u32 2, %s21
      %p212 = scmp.lt.s32.totalorder %s20, 1
      %s213 = scalar_select %p212, %s20, 1
      %p214 = scmp.lt.s32.totalorder %s211, 1
      %s215 = scalar_select %p214, %s211, 1
      %s216 = smul.addr %s213, 4
      %s217 = sadd.s32 %s215, %s216
      %s218 = smul.addr %s217, 8
      %s219 = scalar_lea.vmem %s3, %s218
      %p220 = pneg %p149
      %p221 = pneg %p146
      %s222 = smul.u32 2, %s21
      %p223 = scmp.lt.s32.totalorder %s20, 1
      %s224 = scalar_select %p223, %s20, 1
      %p225 = scmp.lt.s32.totalorder %s222, 1
      %s226 = scalar_select %p225, %s222, 1
      %s227 = smul.addr %s224, 4
      %s228 = sadd.s32 %s226, %s227
      %s229 = smul.addr %s228, 8
      %s230 = scalar_lea.vmem %s4, %s229
      %s231 = smul.u32 2, %s21
      %p232 = scmp.lt.s32.totalorder %s20, 1
      %s233 = scalar_select %p232, %s20, 1
      %p234 = scmp.lt.s32.totalorder %s231, 1
      %s235 = scalar_select %p234, %s231, 1
      %s236 = smul.addr %s233, 2
      %s237 = sadd.s32 %s235, %s236
      %s238 = smul.addr %s237, 4
      %s239 = scalar_lea.vmem %s0, %s238
      %s240 = smul.u32 2, %s21
      %s241 = smul.u32 2, %s21
      %p242 = scmp.lt.s32.totalorder %s20, 1
      %s243 = scalar_select %p242, %s20, 1
      %p244 = scmp.lt.s32.totalorder %s241, 1
      %s245 = scalar_select %p244, %s241, 1
      %s246 = smul.addr %s243, 4
      %s247 = sadd.s32 %s245, %s246
      %s248 = smul.addr %s247, 8
      %s249 = scalar_lea.vmem %s3, %s248
      %s250 = smul.u32 2, %s21
      %s251 = smul.u32 2, %s21
      %p252 = scmp.lt.s32.totalorder %s20, 1
      %s253 = scalar_select %p252, %s20, 1
      %p254 = scmp.lt.s32.totalorder %s251, 1
      %s255 = scalar_select %p254, %s251, 1
      %s256 = smul.addr %s253, 4
      %s257 = sadd.s32 %s255, %s256
      %s258 = smul.addr %s257, 8
      %s259 = scalar_lea.vmem %s4, %s258
      %s260 = smul.u32 2, %s21
      %v261 = vld [vmem:[%s239] sm:$0xff]
      %v262 = vld [vmem:[%s1] sm:$0xff]
      %v263 = vld [vmem:[%s1 + $0x8] sm:$0xff]
      %v264 = vld [vmem:[%s1 + $0x10] sm:$0xff]
      %v265 = vld [vmem:[%s1 + $0x18] sm:$0xf]
      %v266 = vld [vmem:[%s2] sm:$0xff]
      %v267 = vld [vmem:[%s2 + $0x8] sm:$0xff]
      %v268 = vld [vmem:[%s2 + $0x10] sm:$0xff]
      %v269 = vld [vmem:[%s2 + $0x18] sm:$0xf]
      %271 = vset.pattern.permute.xlu0 0
      %272 = vperm.xlu0 %271, %v266
      %v273 = vpop.permute.xlu0 %272
      %276 = vset.pattern.permute.xlu0 0
      %277 = vperm.xlu0 %276, %v267
      %v278 = vpop.permute.xlu0 %277
      %281 = vset.pattern.permute.xlu0 0
      %282 = vperm.xlu0 %281, %v268
      %v283 = vpop.permute.xlu0 %282
      %286 = vset.pattern.permute.xlu0 0
      %287 = vperm.xlu0 %286, %v269
      %v288 = vpop.permute.xlu0 %287
      %291 = vst [vmem:[#allocation1] ss:$2 sm:$0xff] %v261
      %v292 = vld.sshfl [vmem:[#allocation1] sm:$0xff pattern:$0x75316420]
      %v293 = vld.sshfl [vmem:[#allocation1 + $0x8] sm:$0xff pattern:$0x75316420]
      %vm294 = vcmask 31744
      %v296 = vsel %vm294, %v262, 0
      %v299 = vsel %vm294, %v263, 0
      %v302 = vsel %vm294, %v264, 0
      %v305 = vsel %vm294, %v265, 0
      %vm307 = vcmask 1043456
      %v308 = vsel %vm307, %v292, 0
      %v310 = vsel %vm307, %v293, 0
      %312 = vmatpush.msra.mxu0 0.0
      %313 = vmatpush.msra.mxu0 0.0
      %314 = vmatpush.msra.mxu0 0.0
      %315 = vmatpush.msra.mxu0 0.0
      %316 = vmatpush.msra.mxu0 0.0
      %317 = vmatpush.msra.mxu0 0.0
      %318 = vmatpush.msra.mxu0 0.0
      %319 = vmatpush.msra.mxu0 0.0
      %320 = vmatpush.msra.mxu0 0.0
      %321 = vmatpush.msra.mxu0 0.0
      %322 = vmatpush.msra.mxu0 0.0
      %323 = vmatpush.msra.mxu0 0.0
      %324 = vmatpush.msra.mxu0 0.0
      %325 = vmatpush.msra.mxu0 0.0
      %326 = vmatpush.msra.mxu0 0.0
      %327 = vmatpush.msra.mxu0 %v308
      %328 = vmatmul.f32.gmra.mxu0 %v296
      %v329 = vpop.f32.mrf.mxu0
      %v330 = vadd.f32 %v273, %v329
      %331 = vmatmul.f32.gmra.mxu0 %v299
      %v332 = vpop.f32.mrf.mxu0
      %v333 = vadd.f32 %v278, %v332
      %334 = vmatmul.f32.gmra.mxu0 %v302
      %v335 = vpop.f32.mrf.mxu0
      %v336 = vadd.f32 %v283, %v335
      %337 = vmatmul.f32.gmra.mxu0 %v305
      %v338 = vpop.f32.mrf.mxu0
      %v339 = vadd.f32 %v288, %v338
      %340 = vdwg.mxu0
      %341 = vmatpush.msra.mxu0 0.0
      %342 = vmatpush.msra.mxu0 0.0
      %343 = vmatpush.msra.mxu0 0.0
      %344 = vmatpush.msra.mxu0 0.0
      %345 = vmatpush.msra.mxu0 0.0
      %346 = vmatpush.msra.mxu0 0.0
      %347 = vmatpush.msra.mxu0 0.0
      %348 = vmatpush.msra.mxu0 0.0
      %349 = vmatpush.msra.mxu0 0.0
      %350 = vmatpush.msra.mxu0 0.0
      %351 = vmatpush.msra.mxu0 0.0
      %352 = vmatpush.msra.mxu0 0.0
      %353 = vmatpush.msra.mxu0 0.0
      %354 = vmatpush.msra.mxu0 0.0
      %355 = vmatpush.msra.mxu0 0.0
      %356 = vmatpush.msra.mxu0 %v310
      %357 = vmatmul.f32.gmra.mxu0 %v296
      %v358 = vpop.f32.mrf.mxu0
      %v359 = vadd.f32 %v273, %v358
      %360 = vmatmul.f32.gmra.mxu0 %v299
      %v361 = vpop.f32.mrf.mxu0
      %v362 = vadd.f32 %v278, %v361
      %363 = vmatmul.f32.gmra.mxu0 %v302
      %v364 = vpop.f32.mrf.mxu0
      %v365 = vadd.f32 %v283, %v364
      %366 = vmatmul.f32.gmra.mxu0 %v305
      %v367 = vpop.f32.mrf.mxu0
      %v368 = vadd.f32 %v288, %v367
      %369 = vdwg.mxu0
      %370 = vst [vmem:[%s249] sm:$0xff] %v330
      %371 = vst [vmem:[%s249 + $0x8] sm:$0xff] %v359
      %372 = vst [vmem:[%s249 + $0x10] sm:$0x7f] %v333
      %373 = vst [vmem:[%s249 + $0x18] sm:$0x7f] %v362
      %374 = vst [vmem:[%s259] sm:$0xff] %v336
      %375 = vst [vmem:[%s259 + $0x8] sm:$0xff] %v365
      %376 = vst [vmem:[%s259 + $0x10] sm:$0xf] %v339
      %377 = vst [vmem:[%s259 + $0x18] sm:$0xf] %v368
      %s378 = smul.u32 2, %s21
      %p379 = scmp.lt.s32.totalorder %s20, 1
      %s380 = scalar_select %p379, %s20, 1
      %p381 = scmp.lt.s32.totalorder %s378, 1
      %s382 = scalar_select %p381, %s378, 1
      %s383 = smul.addr %s380, 4
      %s384 = sadd.s32 %s382, %s383
      %s385 = smul.addr %s384, 8
      %s386 = scalar_lea.vmem %s3, %s385
      %s387 = smul.u32 2, %s21
      %p388 = scmp.lt.s32.totalorder %s20, 1
      %s389 = scalar_select %p388, %s20, 1
      %p390 = scmp.lt.s32.totalorder %s387, 1
      %s391 = scalar_select %p390, %s387, 1
      %s392 = smul.addr %s389, 4
      %s393 = sadd.s32 %s391, %s392
      %s394 = smul.addr %s393, 8
      %s395 = scalar_lea.vmem %s4, %s394
      // Predicated region
      $region33: #{tpu_custom_call.1} parent=31 // pred_check
        %p396 = pneg %p118
      $region34: #{tpu_custom_call.1} parent=31 // pred_check_branch
        %398 = sbr.rel (%p396) target = $region36
      $region35: #{tpu_custom_call.1} parent=31 // pred_region
        %s399 = smul.u32 2, %s21
      $region36: #{tpu_custom_call.1} parent=31 // pred_fallthru
        _
      // Predicated region
      $region37: #{tpu_custom_call.1} parent=31 // pred_check
        %p400 = pneg %p146
      $region38: #{tpu_custom_call.1} parent=31 // pred_check_branch
        %402 = sbr.rel (%p400) target = $region40
      $region39: #{tpu_custom_call.1} parent=31 // pred_region
        %s403 = smul.u32 2, %s21
      $region40: #{tpu_custom_call.1} parent=31 // pred_fallthru
        _
    $region32: #{tpu_custom_call.1} parent=5 // pred_fallthru
      _
    %p404 = scmp.le.s32.totalorder 2, %s11
    // Predicated region
    $region41: #{tpu_custom_call.1} parent=5 // pred_check
      %p405 = pneg %p404
    $region42: #{tpu_custom_call.1} parent=5 // pred_check_branch
      %407 = sbr.rel (%p405) target = $region44
    $region43: #{tpu_custom_call.1} parent=5 // pred_region
      %s408 = ssub.s32 %s11, 2
      // Predicated region
      $region45: #{tpu_custom_call.1} parent=43 // pred_check
        %p409 = pneg %p124
      $region46: #{tpu_custom_call.1} parent=43 // pred_check_branch
        %411 = sbr.rel (%p409) target = $region48
      $region47: #{tpu_custom_call.1} parent=43 // pred_region
        %s412 = smul.u32 2, %s23
        %p413 = scmp.lt.s32.totalorder %s22, 1
        %s414 = scalar_select %p413, %s22, 1
        %p415 = scmp.lt.s32.totalorder %s412, 1
        %s416 = scalar_select %p415, %s412, 1
        %s417 = smul.addr %s414, 4
        %s418 = sadd.s32 %s416, %s417
        %s419 = smul.addr %s418, 8
        %s420 = scalar_lea.vmem %s3, %s419
      $region48: #{tpu_custom_call.1} parent=43 // pred_fallthru
        _
      // Predicated region
      $region49: #{tpu_custom_call.1} parent=43 // pred_check
        %p421 = pneg %p152
      $region50: #{tpu_custom_call.1} parent=43 // pred_check_branch
        %423 = sbr.rel (%p421) target = $region52
      $region51: #{tpu_custom_call.1} parent=43 // pred_region
        %s424 = smul.u32 2, %s23
        %p425 = scmp.lt.s32.totalorder %s22, 1
        %s426 = scalar_select %p425, %s22, 1
        %p427 = scmp.lt.s32.totalorder %s424, 1
        %s428 = scalar_select %p427, %s424, 1
        %s429 = smul.addr %s426, 4
        %s430 = sadd.s32 %s428, %s429
        %s431 = smul.addr %s430, 8
        %s432 = scalar_lea.vmem %s4, %s431
      $region52: #{tpu_custom_call.1} parent=43 // pred_fallthru
        _
    $region44: #{tpu_custom_call.1} parent=5 // pred_fallthru
      _
  $region6: #{tpu_custom_call.1} parent=0 // loop_footer
    %s15 = sadd.s32 1, %s11
  $region7: #{tpu_custom_call.1} parent=0 // loop_footer_branch
    %10 = sbr.rel target = $region3
  $region8: #{tpu_custom_call.1} parent=0 // loop_exit
    _

// kernel: tpu_custom_call.1
$region0: #{tpu_custom_call.1}
  #allocation0 [shape = 'u32[]', space=smem, size = 0x4, offset = 0x4, fixed_abs, tag = 'smem constant byte address 0x4 - core index']
  #allocation1 [shape = 'u32[72,128]{1,0:T(1,128)}', space=vmem, size = 0x9000, scoped, tag = 'internal scratch']
  %s0 = inlined_call_operand.vmem [shape: f32[2,4,256], index: 0, kind: input, shape index: {}]
  %s1 = inlined_call_operand.vmem [shape: f32[28,4], index: 1, kind: input, shape index: {}]
  %s2 = inlined_call_operand.vmem [shape: f32[28,1], index: 2, kind: input, shape index: {}]
  %s3 = inlined_call_operand.vmem [shape: f32[2,15,256], index: 3, kind: output, shape index: {0}]
  %s4 = inlined_call_operand.vmem [shape: f32[2,12,256], index: 4, kind: output, shape index: {1}]
  %5 = xla_tuple %s3, %s4
  %s6 = sld [smem:[#allocation0]]
  $region53: #{tpu_custom_call.1} parent=0
    _
  %s8 = ssub.s32 1, %s6
  %s9 = scalar_select 0, %s8, %s6
  loop: start=0, step=1, limit=4
  $region2: #{tpu_custom_call.1} parent=0 // loop_pre_header
    _
  $region3: #{tpu_custom_call.1} parent=0 // loop_header
    %s11 = sphi 0, %s15
    %p12 = scmp.ge.s32.totalorder %s11, 4
    %s18 = sphi 0, %s30
    %s19 = sphi 0, %s26
    %s20 = sphi 0, %s18
    %s21 = sphi 0, %s19
    %s22 = sphi 0, %s20
    %s23 = sphi 0, %s21
    %s35 = sphi 0, %s37
    %s38 = sphi 0, %s35
    %s39 = sphi 0, %s38
    %s55 = sphi 0, %s39
    %s59 = sphi 0, %s59
    %s61 = sphi 0, %s59
    %s62 = sphi 0, %s61
    %s76 = sphi 0, %s62
    %s80 = sphi 0, %s80
    %s82 = sphi 0, %s80
    %s83 = sphi 0, %s82
    %s97 = sphi 0, %s83
    %s105 = sphi 0, %s107
    %s108 = sphi 0, %s105
    %s109 = sphi 0, %s108
    %s125 = sphi 0, %s109
    %s133 = sphi 0, %s135
    %s136 = sphi 0, %s133
    %s137 = sphi 0, %s136
    %s153 = sphi 0, %s137
  $region4: #{tpu_custom_call.1} parent=0 // loop_header_branch
    %14 = sbr.rel (%p12) target = $region8
  $region5: #{tpu_custom_call.1} parent=0 // loop_body
    %s16 = ssub.s32 %s11, 1
    %s17 = ssub.s32 %s11, 2
    %s24 = sadd.s32 1, %s19
    %p25 = scmp.ge.s32.totalorder %s24, 1
    %s26 = scalar_select %p25, 0, %s24
    %s27 = sadd.s32 1, %s18
    %s28 = scalar_select %p25, %s27, %s18
    %p29 = scmp.ge.s32.totalorder %s28, 2
    %s30 = scalar_select %p29, 0, %s28
    %s31 = ssub.s32 %s18, %s30
    %s32 = ssub.s32 %s19, %s26
    %s33 = sor.u32 %s31, %s32
    %p34 = scmp.eq.s32.totalorder %s33, 0
    %s36 = sadd.s32 %s35, 1
    %s37 = scalar_select %p34, %s35, %s36
    %p40 = pneg %p34
    %p41 = scmp.eq.s32.totalorder %s11, 1
    %p42 = por %p40, %p41
    %p43 = scmp.ne.s32.totalorder %s35, %s38
    %p44 = scmp.eq.s32.totalorder %s11, 0
    %p45 = por %p43, %p44
    %p46 = scmp.ne.s32.totalorder %s35, %s38
    %p47 = scmp.eq.s32.totalorder %s16, 1
    %p48 = por %p46, %p47
    %p49 = scmp.ne.s32.totalorder %s38, %s39
    %p50 = scmp.eq.s32.totalorder %s16, 0
    %p51 = por %p49, %p50
    %p52 = scmp.ne.s32.totalorder %s38, %s39
    %p53 = scmp.eq.s32.totalorder %s17, 1
    %p54 = por %p52, %p53
    %p56 = scmp.ne.s32.totalorder %s39, %s55
    %p57 = scmp.eq.s32.totalorder %s17, 0
    %p58 = por %p56, %p57
    %s60 = sadd.s32 %s59, 1
    %p63 = scmp.eq.s32.totalorder %s11, 1
    %p64 = scmp.ne.s32.totalorder %s59, %s61
    %p65 = scmp.eq.s32.totalorder %s11, 0
    %p66 = por %p64, %p65
    %p67 = scmp.ne.s32.totalorder %s59, %s61
    %p68 = scmp.eq.s32.totalorder %s16, 1
    %p69 = por %p67, %p68
    %p70 = scmp.ne.s32.totalorder %s61, %s62
    %p71 = scmp.eq.s32.totalorder %s16, 0
    %p72 = por %p70, %p71
    %p73 = scmp.ne.s32.totalorder %s61, %s62
    %p74 = scmp.eq.s32.totalorder %s17, 1
    %p75 = por %p73, %p74
    %p77 = scmp.ne.s32.totalorder %s62, %s76
    %p78 = scmp.eq.s32.totalorder %s17, 0
    %p79 = por %p77, %p78
    %s81 = sadd.s32 %s80, 1
    %p84 = scmp.eq.s32.totalorder %s11, 1
    %p85 = scmp.ne.s32.totalorder %s80, %s82
    %p86 = scmp.eq.s32.totalorder %s11, 0
    %p87 = por %p85, %p86
    %p88 = scmp.ne.s32.totalorder %s80, %s82
    %p89 = scmp.eq.s32.totalorder %s16, 1
    %p90 = por %p88, %p89
    %p91 = scmp.ne.s32.totalorder %s82, %s83
    %p92 = scmp.eq.s32.totalorder %s16, 0
    %p93 = por %p91, %p92
    %p94 = scmp.ne.s32.totalorder %s82, %s83
    %p95 = scmp.eq.s32.totalorder %s17, 1
    %p96 = por %p94, %p95
    %p98 = scmp.ne.s32.totalorder %s83, %s97
    %p99 = scmp.eq.s32.totalorder %s17, 0
    %p100 = por %p98, %p99
    %s101 = ssub.s32 %s18, %s30
    %s102 = ssub.s32 %s19, %s26
    %s103 = sor.u32 %s101, %s102
    %p104 = scmp.eq.s32.totalorder %s103, 0
    %s106 = sadd.s32 %s105, 1
    %s107 = scalar_select %p104, %s105, %s106
    %p110 = pneg %p104
    %p111 = scmp.eq.s32.totalorder %s11, 1
    %p112 = por %p110, %p111
    %p113 = scmp.ne.s32.totalorder %s105, %s108
    %p114 = scmp.eq.s32.totalorder %s11, 0
    %p115 = por %p113, %p114
    %p116 = scmp.ne.s32.totalorder %s105, %s108
    %p117 = scmp.eq.s32.totalorder %s16, 1
    %p118 = por %p116, %p117
    %p119 = scmp.ne.s32.totalorder %s108, %s109
    %p120 = scmp.eq.s32.totalorder %s16, 0
    %p121 = por %p119, %p120
    %p122 = scmp.ne.s32.totalorder %s108, %s109
    %p123 = scmp.eq.s32.totalorder %s17, 1
    %p124 = por %p122, %p123
    %p126 = scmp.ne.s32.totalorder %s109, %s125
    %p127 = scmp.eq.s32.totalorder %s17, 0
    %p128 = por %p126, %p127
    %s129 = ssub.s32 %s18, %s30
    %s130 = ssub.s32 %s19, %s26
    %s131 = sor.u32 %s129, %s130
    %p132 = scmp.eq.s32.totalorder %s131, 0
    %s134 = sadd.s32 %s133, 1
    %s135 = scalar_select %p132, %s133, %s134
    %p138 = pneg %p132
    %p139 = scmp.eq.s32.totalorder %s11, 1
    %p140 = por %p138, %p139
    %p141 = scmp.ne.s32.totalorder %s133, %s136
    %p142 = scmp.eq.s32.totalorder %s11, 0
    %p143 = por %p141, %p142
    %p144 = scmp.ne.s32.totalorder %s133, %s136
    %p145 = scmp.eq.s32.totalorder %s16, 1
    %p146 = por %p144, %p145
    %p147 = scmp.ne.s32.totalorder %s136, %s137
    %p148 = scmp.eq.s32.totalorder %s16, 0
    %p149 = por %p147, %p148
    %p150 = scmp.ne.s32.totalorder %s136, %s137
    %p151 = scmp.eq.s32.totalorder %s17, 1
    %p152 = por %p150, %p151
    %p154 = scmp.ne.s32.totalorder %s137, %s153
    %p155 = scmp.eq.s32.totalorder %s17, 0
    %p156 = por %p154, %p155
    %p157 = scmp.le.s32.totalorder 1, %s11
    %p158 = scmp.lt.s32.totalorder %s11, 3
    %p159 = pnand %p157, %p158
    %p160 = pneg %p159
    // Predicated region
    $region9: #{tpu_custom_call.1} parent=5 // pred_check
      _
    $region10: #{tpu_custom_call.1} parent=5 // pred_check_branch
      %162 = sbr.rel (%p159) target = $region12
    $region11: #{tpu_custom_call.1} parent=5 // pred_region
      %s163 = ssub.s32 %s11, 1
      // Predicated region
      $region13: #{tpu_custom_call.1} parent=11 // pred_check
        %p164 = pneg %p72
      $region14: #{tpu_custom_call.1} parent=11 // pred_check_branch
        %166 = sbr.rel (%p164) target = $region16
      $region15: #{tpu_custom_call.1} parent=11 // pred_region
        _
      $region16: #{tpu_custom_call.1} parent=11 // pred_fallthru
        _
      // Predicated region
      $region17: #{tpu_custom_call.1} parent=11 // pred_check
        %p167 = pneg %p93
      $region18: #{tpu_custom_call.1} parent=11 // pred_check_branch
        %169 = sbr.rel (%p167) target = $region20
      $region19: #{tpu_custom_call.1} parent=11 // pred_region
        _
      $region20: #{tpu_custom_call.1} parent=11 // pred_fallthru
        _
    $region12: #{tpu_custom_call.1} parent=5 // pred_fallthru
      _
    %p170 = scmp.lt.s32.totalorder %s11, 2
    // Predicated region
    $region21: #{tpu_custom_call.1} parent=5 // pred_check
      %p171 = pneg %p170
    $region22: #{tpu_custom_call.1} parent=5 // pred_check_branch
      %173 = sbr.rel (%p171) target = $region24
    $region23: #{tpu_custom_call.1} parent=5 // pred_region
      // Predicated region
      $region25: #{tpu_custom_call.1} parent=23 // pred_check
        %p174 = pneg %p45
      $region26: #{tpu_custom_call.1} parent=23 // pred_check_branch
        %176 = sbr.rel (%p174) target = $region28
      $region27: #{tpu_custom_call.1} parent=23 // pred_region
        %s177 = smul.u32 2, %s19
        %p178 = scmp.lt.s32.totalorder %s18, 1
        %s179 = scalar_select %p178, %s18, 1
        %p180 = scmp.lt.s32.totalorder %s177, 1
        %s181 = scalar_select %p180, %s177, 1
        %s182 = smul.addr %s179, 2
        %s183 = sadd.s32 %s181, %s182
        %s184 = smul.addr %s183, 4
        %s185 = scalar_lea.vmem %s0, %s184
        %s186 = smul.u32 2, %s19
      $region28: #{tpu_custom_call.1} parent=23 // pred_fallthru
        _
    $region24: #{tpu_custom_call.1} parent=5 // pred_fallthru
      _
    %p187 = scmp.le.s32.totalorder 1, %s11
    %p188 = scmp.lt.s32.totalorder %s11, 3
    %p189 = pnand %p187, %p188
    %p190 = pneg %p189
    // Predicated region
    $region29: #{tpu_custom_call.1} parent=5 // pred_check
      _
    $region30: #{tpu_custom_call.1} parent=5 // pred_check_branch
      %192 = sbr.rel (%p189) target = $region32
    $region31: #{tpu_custom_call.1} parent=5 // pred_region
      %s193 = ssub.s32 %s11, 1
      %s194 = smul.u32 2, %s21
      %p195 = scmp.lt.s32.totalorder %s20, 1
      %s196 = scalar_select %p195, %s20, 1
      %p197 = scmp.lt.s32.totalorder %s194, 1
      %s198 = scalar_select %p197, %s194, 1
      %s199 = smul.addr %s196, 2
      %s200 = sadd.s32 %s198, %s199
      %s201 = smul.addr %s200, 4
      %s202 = scalar_lea.vmem %s0, %s201
      %p203 = pneg %p51
      %p204 = pneg %p48
      %p205 = pneg %p72
      %p206 = pneg %p69
      %p207 = pneg %p93
      %p208 = pneg %p90
      %p209 = pneg %p121
      %p210 = pneg %p118
      %s211 = smul.u32 2, %s21
      %p212 = scmp.lt.s32.totalorder %s20, 1
      %s213 = scalar_select %p212, %s20, 1
      %p214 = scmp.lt.s32.totalorder %s211, 1
      %s215 = scalar_select %p214, %s211, 1
      %s216 = smul.addr %s213, 4
      %s217 = sadd.s32 %s215, %s216
      %s218 = smul.addr %s217, 8
      %s219 = scalar_lea.vmem %s3, %s218
      %p220 = pneg %p149
      %p221 = pneg %p146
      %s222 = smul.u32 2, %s21
      %p223 = scmp.lt.s32.totalorder %s20, 1
      %s224 = scalar_select %p223, %s20, 1
      %p225 = scmp.lt.s32.totalorder %s222, 1
      %s226 = scalar_select %p225, %s222, 1
      %s227 = smul.addr %s224, 4
      %s228 = sadd.s32 %s226, %s227
      %s229 = smul.addr %s228, 8
      %s230 = scalar_lea.vmem %s4, %s229
      %s231 = smul.u32 2, %s21
      %p232 = scmp.lt.s32.totalorder %s20, 1
      %s233 = scalar_select %p232, %s20, 1
      %p234 = scmp.lt.s32.totalorder %s231, 1
      %s235 = scalar_select %p234, %s231, 1
      %s236 = smul.addr %s233, 2
      %s237 = sadd.s32 %s235, %s236
      %s238 = smul.addr %s237, 4
      %s239 = scalar_lea.vmem %s0, %s238
      %s240 = smul.u32 2, %s21
      %s241 = smul.u32 2, %s21
      %p242 = scmp.lt.s32.totalorder %s20, 1
      %s243 = scalar_select %p242, %s20, 1
      %p244 = scmp.lt.s32.totalorder %s241, 1
      %s245 = scalar_select %p244, %s241, 1
      %s246 = smul.addr %s243, 4
      %s247 = sadd.s32 %s245, %s246
      %s248 = smul.addr %s247, 8
      %s249 = scalar_lea.vmem %s3, %s248
      %s250 = smul.u32 2, %s21
      %s251 = smul.u32 2, %s21
      %p252 = scmp.lt.s32.totalorder %s20, 1
      %s253 = scalar_select %p252, %s20, 1
      %p254 = scmp.lt.s32.totalorder %s251, 1
      %s255 = scalar_select %p254, %s251, 1
      %s256 = smul.addr %s253, 4
      %s257 = sadd.s32 %s255, %s256
      %s258 = smul.addr %s257, 8
      %s259 = scalar_lea.vmem %s4, %s258
      %s260 = smul.u32 2, %s21
      %v261 = vld [vmem:[%s239] sm:$0xff]
      %v262 = vld [vmem:[%s1] sm:$0xff]
      %v263 = vld [vmem:[%s1 + $0x8] sm:$0xff]
      %v264 = vld [vmem:[%s1 + $0x10] sm:$0xff]
      %v265 = vld [vmem:[%s1 + $0x18] sm:$0xf]
      %v266 = vld [vmem:[%s2] sm:$0xff]
      %v267 = vld [vmem:[%s2 + $0x8] sm:$0xff]
      %v268 = vld [vmem:[%s2 + $0x10] sm:$0xff]
      %v269 = vld [vmem:[%s2 + $0x18] sm:$0xf]
      %271 = vset.pattern.permute.xlu0 0
      %272 = vperm.xlu0 %271, %v266
      %v273 = vpop.permute.xlu0 %272
      %276 = vset.pattern.permute.xlu0 0
      %277 = vperm.xlu0 %276, %v267
      %v278 = vpop.permute.xlu0 %277
      %281 = vset.pattern.permute.xlu0 0
      %282 = vperm.xlu0 %281, %v268
      %v283 = vpop.permute.xlu0 %282
      %286 = vset.pattern.permute.xlu0 0
      %287 = vperm.xlu0 %286, %v269
      %v288 = vpop.permute.xlu0 %287
      %291 = vst [vmem:[#allocation1] ss:$2 sm:$0xff] %v261
      %v292 = vld.sshfl [vmem:[#allocation1] sm:$0xff pattern:$0x75316420]
      %v293 = vld.sshfl [vmem:[#allocation1 + $0x8] sm:$0xff pattern:$0x75316420]
      %vm294 = vcmask 31744
      %v296 = vsel %vm294, %v262, 0
      %v299 = vsel %vm294, %v263, 0
      %v302 = vsel %vm294, %v264, 0
      %v305 = vsel %vm294, %v265, 0
      %vm307 = vcmask 1043456
      %v308 = vsel %vm307, %v292, 0
      %v310 = vsel %vm307, %v293, 0
      %312 = vmatpush.msra.mxu0 0.0
      %313 = vmatpush.msra.mxu0 0.0
      %314 = vmatpush.msra.mxu0 0.0
      %315 = vmatpush.msra.mxu0 0.0
      %316 = vmatpush.msra.mxu0 0.0
      %317 = vmatpush.msra.mxu0 0.0
      %318 = vmatpush.msra.mxu0 0.0
      %319 = vmatpush.msra.mxu0 0.0
      %320 = vmatpush.msra.mxu0 0.0
      %321 = vmatpush.msra.mxu0 0.0
      %322 = vmatpush.msra.mxu0 0.0
      %323 = vmatpush.msra.mxu0 0.0
      %324 = vmatpush.msra.mxu0 0.0
      %325 = vmatpush.msra.mxu0 0.0
      %326 = vmatpush.msra.mxu0 0.0
      %327 = vmatpush.msra.mxu0 %v308
      %328 = vmatmul.f32.gmra.mxu0 %v296
      %v329 = vpop.f32.mrf.mxu0
      %v330 = vadd.f32 %v273, %v329
      %331 = vmatmul.f32.gmra.mxu0 %v299
      %v332 = vpop.f32.mrf.mxu0
      %v333 = vadd.f32 %v278, %v332
      %334 = vmatmul.f32.gmra.mxu0 %v302
      %v335 = vpop.f32.mrf.mxu0
      %v336 = vadd.f32 %v283, %v335
      %337 = vmatmul.f32.gmra.mxu0 %v305
      %v338 = vpop.f32.mrf.mxu0
      %v339 = vadd.f32 %v288, %v338
      %340 = vdwg.mxu0
      %341 = vmatpush.msra.mxu0 0.0
      %342 = vmatpush.msra.mxu0 0.0
      %343 = vmatpush.msra.mxu0 0.0
      %344 = vmatpush.msra.mxu0 0.0
      %345 = vmatpush.msra.mxu0 0.0
      %346 = vmatpush.msra.mxu0 0.0
      %347 = vmatpush.msra.mxu0 0.0
      %348 = vmatpush.msra.mxu0 0.0
      %349 = vmatpush.msra.mxu0 0.0
      %350 = vmatpush.msra.mxu0 0.0
      %351 = vmatpush.msra.mxu0 0.0
      %352 = vmatpush.msra.mxu0 0.0
      %353 = vmatpush.msra.mxu0 0.0
      %354 = vmatpush.msra.mxu0 0.0
      %355 = vmatpush.msra.mxu0 0.0
      %356 = vmatpush.msra.mxu0 %v310
      %357 = vmatmul.f32.gmra.mxu0 %v296
      %v358 = vpop.f32.mrf.mxu0
      %v359 = vadd.f32 %v273, %v358
      %360 = vmatmul.f32.gmra.mxu0 %v299
      %v361 = vpop.f32.mrf.mxu0
      %v362 = vadd.f32 %v278, %v361
      %363 = vmatmul.f32.gmra.mxu0 %v302
      %v364 = vpop.f32.mrf.mxu0
      %v365 = vadd.f32 %v283, %v364
      %366 = vmatmul.f32.gmra.mxu0 %v305
      %v367 = vpop.f32.mrf.mxu0
      %v368 = vadd.f32 %v288, %v367
      %369 = vdwg.mxu0
      %370 = vst [vmem:[%s249] sm:$0xff] %v330
      %371 = vst [vmem:[%s249 + $0x8] sm:$0xff] %v359
      %372 = vst [vmem:[%s249 + $0x10] sm:$0x7f] %v333
      %373 = vst [vmem:[%s249 + $0x18] sm:$0x7f] %v362
      %374 = vst [vmem:[%s259] sm:$0xff] %v336
      %375 = vst [vmem:[%s259 + $0x8] sm:$0xff] %v365
      %376 = vst [vmem:[%s259 + $0x10] sm:$0xf] %v339
      %377 = vst [vmem:[%s259 + $0x18] sm:$0xf] %v368
      %s378 = smul.u32 2, %s21
      %p379 = scmp.lt.s32.totalorder %s20, 1
      %s380 = scalar_select %p379, %s20, 1
      %p381 = scmp.lt.s32.totalorder %s378, 1
      %s382 = scalar_select %p381, %s378, 1
      %s383 = smul.addr %s380, 4
      %s384 = sadd.s32 %s382, %s383
      %s385 = smul.addr %s384, 8
      %s386 = scalar_lea.vmem %s3, %s385
      %s387 = smul.u32 2, %s21
      %p388 = scmp.lt.s32.totalorder %s20, 1
      %s389 = scalar_select %p388, %s20, 1
      %p390 = scmp.lt.s32.totalorder %s387, 1
      %s391 = scalar_select %p390, %s387, 1
      %s392 = smul.addr %s389, 4
      %s393 = sadd.s32 %s391, %s392
      %s394 = smul.addr %s393, 8
      %s395 = scalar_lea.vmem %s4, %s394
      // Predicated region
      $region33: #{tpu_custom_call.1} parent=31 // pred_check
        %p396 = pneg %p118
      $region34: #{tpu_custom_call.1} parent=31 // pred_check_branch
        %398 = sbr.rel (%p396) target = $region36
      $region35: #{tpu_custom_call.1} parent=31 // pred_region
        %s399 = smul.u32 2, %s21
      $region36: #{tpu_custom_call.1} parent=31 // pred_fallthru
        _
      // Predicated region
      $region37: #{tpu_custom_call.1} parent=31 // pred_check
        %p400 = pneg %p146
      $region38: #{tpu_custom_call.1} parent=31 // pred_check_branch
        %402 = sbr.rel (%p400) target = $region40
      $region39: #{tpu_custom_call.1} parent=31 // pred_region
        %s403 = smul.u32 2, %s21
      $region40: #{tpu_custom_call.1} parent=31 // pred_fallthru
        _
    $region32: #{tpu_custom_call.1} parent=5 // pred_fallthru
      _
    %p404 = scmp.le.s32.totalorder 2, %s11
    // Predicated region
    $region41: #{tpu_custom_call.1} parent=5 // pred_check
      %p405 = pneg %p404
    $region42: #{tpu_custom_call.1} parent=5 // pred_check_branch
      %407 = sbr.rel (%p405) target = $region44
    $region43: #{tpu_custom_call.1} parent=5 // pred_region
      %s408 = ssub.s32 %s11, 2
      // Predicated region
      $region45: #{tpu_custom_call.1} parent=43 // pred_check
        %p409 = pneg %p124
      $region46: #{tpu_custom_call.1} parent=43 // pred_check_branch
        %411 = sbr.rel (%p409) target = $region48
      $region47: #{tpu_custom_call.1} parent=43 // pred_region
        %s412 = smul.u32 2, %s23
        %p413 = scmp.lt.s32.totalorder %s22, 1
        %s414 = scalar_select %p413, %s22, 1
        %p415 = scmp.lt.s32.totalorder %s412, 1
        %s416 = scalar_select %p415, %s412, 1
        %s417 = smul.addr %s414, 4
        %s418 = sadd.s32 %s416, %s417
        %s419 = smul.addr %s418, 8
        %s420 = scalar_lea.vmem %s3, %s419
      $region48: #{tpu_custom_call.1} parent=43 // pred_fallthru
        _
      // Predicated region
      $region49: #{tpu_custom_call.1} parent=43 // pred_check
        %p421 = pneg %p152
      $region50: #{tpu_custom_call.1} parent=43 // pred_check_branch
        %423 = sbr.rel (%p421) target = $region52
      $region51: #{tpu_custom_call.1} parent=43 // pred_region
        %s424 = smul.u32 2, %s23
        %p425 = scmp.lt.s32.totalorder %s22, 1
        %s426 = scalar_select %p425, %s22, 1
        %p427 = scmp.lt.s32.totalorder %s424, 1
        %s428 = scalar_select %p427, %s424, 1
        %s429 = smul.addr %s426, 4
        %s430 = sadd.s32 %s428, %s429
        %s431 = smul.addr %s430, 8
        %s432 = scalar_lea.vmem %s4, %s431
      $region52: #{tpu_custom_call.1} parent=43 // pred_fallthru
        _
    $region44: #{tpu_custom_call.1} parent=5 // pred_fallthru
      _
  $region6: #{tpu_custom_call.1} parent=0 // loop_footer
    %s15 = sadd.s32 1, %s11
  $region7: #{tpu_custom_call.1} parent=0 // loop_footer_branch
    %10 = sbr.rel target = $region3
  $region8: #{tpu_custom_call.1} parent=0 // loop_exit
    _

</llo_original>
